<compile_context>
chip_gen: v7x
topology: tpu7x:2x2x1
jax: 0.10.0
libtpu: 0.0.40
codegen_flags: <defaults>
</compile_context>

<pallas_src>
import functools

import jax
import jax.numpy as jnp
from jax.experimental import pallas as pl
from jax.experimental.pallas import tpu as pltpu


D_IN, H1, H2, D_OUT = 35, 512, 256, 1
DROP_P = 0.1
KEEP_P = 1.0 - DROP_P
MAX_BLOCK_ROWS = 1024  # per-generation safe block size (fits v7x 64 MiB easily)


def _round_up(n, m):
    return ((n + m - 1) // m) * m


def net_sgd_kernel(x_ref, u1_ref, u2_ref,
                   w1_ref, b1_ref, w2_ref, b2_ref, w3_ref, b3_ref,
                   o_ref):
    keep_p = jnp.float32(KEEP_P)
    inv_keep = jnp.float32(1.0 / KEEP_P)

    # fc1 (MXU, bf16 operands, f32 accumulate) + fused dropout/relu/scale
    x = x_ref[...].astype(jnp.bfloat16)
    h1 = jnp.dot(x, w1_ref[...], preferred_element_type=jnp.float32) + b1_ref[...]
    keep1 = jnp.logical_and(u1_ref[...] < keep_p, h1 > 0.0)
    h1 = jnp.where(keep1, h1 * inv_keep, 0.0)

    # fc2 + fused dropout/relu/scale
    h2 = jnp.dot(h1.astype(jnp.bfloat16), w2_ref[...],
                 preferred_element_type=jnp.float32) + b2_ref[...]
    keep2 = jnp.logical_and(u2_ref[...] < keep_p, h2 > 0.0)
    h2 = jnp.where(keep2, h2 * inv_keep, 0.0)

    # fc3 + sigmoid
    # TODO(synk): fc3 output is lane-sparse (N=1); a lane-dense (1, BLK) writeback
    # would remove masked stores, but it is <1% of FLOPs.
    z = jnp.dot(h2.astype(jnp.bfloat16), w3_ref[...],
                preferred_element_type=jnp.float32) + b3_ref[...]
    o_ref[...] = jax.nn.sigmoid(z).astype(o_ref.dtype)


@functools.partial(jax.jit, static_argnames=("block_rows",))
def net_sgd_forward(x, params, key, block_rows=MAX_BLOCK_ROWS):
    """x: (B, 35) f32. params: dict of f32 weights/biases. key: jax PRNG key.

    Dropout is active (training-mode forward), matching F.dropout defaults.
    """
    B = x.shape[0]
    blk = min(block_rows, _round_up(B, 8))
    b_pad = _round_up(B, blk)
    if b_pad != B:
        x = jnp.pad(x, ((0, b_pad - B), (0, 0)))

    k1, k2 = jax.random.split(key)
    u1 = jax.random.uniform(k1, (b_pad, H1), dtype=jnp.float32)
    u2 = jax.random.uniform(k2, (b_pad, H2), dtype=jnp.float32)

    # Cast weights to bf16 once (halves weight HBM/VMEM traffic; MXU is natively bf16).
    w1 = params["w1"].astype(jnp.bfloat16)
    w2 = params["w2"].astype(jnp.bfloat16)
    w3 = params["w3"].astype(jnp.bfloat16)
    b1, b2, b3 = params["b1"], params["b2"], params["b3"]

    grid = (pl.cdiv(b_pad, blk),)
    batch_spec = lambda cols: pl.BlockSpec((blk, cols), lambda i: (i, 0))
    resident = lambda shape: pl.BlockSpec(shape, lambda i: (0, 0))

    out = pl.pallas_call(
        net_sgd_kernel,
        out_shape=jax.ShapeDtypeStruct((b_pad, D_OUT), jnp.float32),
        grid=grid,
        in_specs=[
            batch_spec(D_IN),          # x
            batch_spec(H1),            # u1 (dropout uniforms, layer 1)
            batch_spec(H2),            # u2 (dropout uniforms, layer 2)
            resident((D_IN, H1)),      # w1
            resident((1, H1)),         # b1
            resident((H1, H2)),        # w2
            resident((1, H2)),         # b2
            resident((H2, D_OUT)),     # w3
            resident((1, D_OUT)),      # b3
        ],
        out_specs=batch_spec(D_OUT),
        compiler_params=pltpu.CompilerParams(
            dimension_semantics=("parallel",),
            vmem_limit_bytes=64 * 1024 * 1024,
        ),
    )(x, u1, u2, w1, b1, w2, b2, w3, b3)

    return out[:B]


def init_params(key):
    """PyTorch-style init: U(-1/sqrt(fan_in), 1/sqrt(fan_in))."""
    ks = jax.random.split(key, 6)

    def lin(kw, kb, fan_in, fan_out):
        bound = 1.0 / jnp.sqrt(jnp.float32(fan_in))
        w = jax.random.uniform(kw, (fan_in, fan_out), jnp.float32, -bound, bound)
        b = jax.random.uniform(kb, (1, fan_out), jnp.float32, -bound, bound)
        return w, b

    w1, b1 = lin(ks[0], ks[1], D_IN, H1)
    w2, b2 = lin(ks[2], ks[3], H1, H2)
    w3, b3 = lin(ks[4], ks[5], H2, D_OUT)
    return {"w1": w1, "b1": b1, "w2": w2, "b2": b2, "w3": w3, "b3": b3}


if __name__ == "__main__":
    key = jax.random.PRNGKey(0)
    pkey, xkey, dkey = jax.random.split(key, 3)

    params = init_params(pkey)
    B = 8
    x = jax.random.normal(xkey, (B, D_IN), dtype=jnp.float32)

    out = net_sgd_forward(x, params, dkey)
    out = jax.block_until_ready(out)

    assert out.shape == (B, D_OUT)
    assert bool(jnp.all(jnp.isfinite(out)))
    assert bool(jnp.all((out >= 0.0) & (out <= 1.0)))
    print("KERNEL_OK")
</pallas_src>

<mosaic_0001>
module attributes {stable_mosaic.version = 11 : i64} {
  func.func @net_sgd_kernel(%arg0: i32, %arg1: memref<8x35xf32, #tpu.memory_space<vmem>>, %arg2: memref<8x512xf32, #tpu.memory_space<vmem>>, %arg3: memref<8x256xf32, #tpu.memory_space<vmem>>, %arg4: memref<35x512xbf16, #tpu.memory_space<vmem>>, %arg5: memref<1x512xf32, #tpu.memory_space<vmem>>, %arg6: memref<512x256xbf16, #tpu.memory_space<vmem>>, %arg7: memref<1x256xf32, #tpu.memory_space<vmem>>, %arg8: memref<256x1xbf16, #tpu.memory_space<vmem>>, %arg9: memref<1x1xf32, #tpu.memory_space<vmem>>, %arg10: memref<8x1xf32, #tpu.memory_space<vmem>>) attributes {dimension_semantics = [#tpu.dimension_semantics<parallel>], iteration_bounds = array<i64: 1>, scalar_prefetch = 0 : i64, scratch_operands = 0 : i64, tpu.core_type = #tpu.core_type<tc>, window_params = [{transform_indices = @transform_0, window_bounds = array<i64: 8, 35>}, {transform_indices = @transform_1, window_bounds = array<i64: 8, 512>}, {transform_indices = @transform_2, window_bounds = array<i64: 8, 256>}, {pipeline_mode = #tpu.pipeline_mode<synchronous>, transform_indices = @transform_3, window_bounds = array<i64: 35, 512>}, {pipeline_mode = #tpu.pipeline_mode<synchronous>, transform_indices = @transform_4, window_bounds = array<i64: 1, 512>}, {pipeline_mode = #tpu.pipeline_mode<synchronous>, transform_indices = @transform_5, window_bounds = array<i64: 512, 256>}, {pipeline_mode = #tpu.pipeline_mode<synchronous>, transform_indices = @transform_6, window_bounds = array<i64: 1, 256>}, {pipeline_mode = #tpu.pipeline_mode<synchronous>, transform_indices = @transform_7, window_bounds = array<i64: 256, 1>}, {pipeline_mode = #tpu.pipeline_mode<synchronous>, transform_indices = @transform_8, window_bounds = array<i64: 1, 1>}, {transform_indices = @transform_9, window_bounds = array<i64: 8, 1>}]} {
    %c0 = arith.constant 0 : index
    %c0_0 = arith.constant 0 : index
    %0 = vector.load %arg1[%c0, %c0_0] : memref<8x35xf32, #tpu.memory_space<vmem>>, vector<8x35xf32>
    %1 = arith.truncf %0 : vector<8x35xf32> to vector<8x35xbf16>
    %c0_1 = arith.constant 0 : index
    %c0_2 = arith.constant 0 : index
    %2 = vector.load %arg4[%c0_1, %c0_2] : memref<35x512xbf16, #tpu.memory_space<vmem>>, vector<35x512xbf16>
    %cst = arith.constant dense<0.000000e+00> : vector<8x512xf32>
    %3 = tpu.matmul %1, %2, %cst {dimension_numbers = #tpu.dot_dimension_numbers<[1], [0], [0], [1], [0, 0, 1, 1], [], []>} : vector<8x35xbf16>, vector<35x512xbf16>, vector<8x512xf32> -> vector<8x512xf32>
    %c0_3 = arith.constant 0 : index
    %c0_4 = arith.constant 0 : index
    %4 = vector.load %arg5[%c0_3, %c0_4] : memref<1x512xf32, #tpu.memory_space<vmem>>, vector<1x512xf32>
    %5 = vector.broadcast %4 : vector<1x512xf32> to vector<8x512xf32>
    %6 = arith.addf %3, %5 : vector<8x512xf32>
    %c0_5 = arith.constant 0 : index
    %c0_6 = arith.constant 0 : index
    %7 = vector.load %arg2[%c0_5, %c0_6] : memref<8x512xf32, #tpu.memory_space<vmem>>, vector<8x512xf32>
    %cst_7 = arith.constant 0.899999976 : f32
    %8 = vector.broadcast %cst_7 : f32 to vector<8x512xf32>
    %9 = arith.cmpf olt, %7, %8 : vector<8x512xf32>
    %cst_8 = arith.constant 0.000000e+00 : f32
    %10 = vector.broadcast %cst_8 : f32 to vector<8x512xf32>
    %11 = arith.cmpf ogt, %6, %10 : vector<8x512xf32>
    %12 = arith.andi %9, %11 : vector<8x512xi1>
    %cst_9 = arith.constant 1.11111116 : f32
    %13 = vector.broadcast %cst_9 : f32 to vector<8x512xf32>
    %14 = arith.mulf %6, %13 : vector<8x512xf32>
    %cst_10 = arith.constant 0.000000e+00 : f32
    %15 = vector.broadcast %cst_10 : f32 to vector<8x512xf32>
    %16 = arith.select %12, %14, %15 : vector<8x512xi1>, vector<8x512xf32>
    %17 = arith.truncf %16 : vector<8x512xf32> to vector<8x512xbf16>
    %c0_11 = arith.constant 0 : index
    %c0_12 = arith.constant 0 : index
    %18 = vector.load %arg6[%c0_11, %c0_12] : memref<512x256xbf16, #tpu.memory_space<vmem>>, vector<512x256xbf16>
    %cst_13 = arith.constant dense<0.000000e+00> : vector<8x256xf32>
    %19 = tpu.matmul %17, %18, %cst_13 {dimension_numbers = #tpu.dot_dimension_numbers<[1], [0], [0], [1], [0, 0, 1, 1], [], []>} : vector<8x512xbf16>, vector<512x256xbf16>, vector<8x256xf32> -> vector<8x256xf32>
    %c0_14 = arith.constant 0 : index
    %c0_15 = arith.constant 0 : index
    %20 = vector.load %arg7[%c0_14, %c0_15] : memref<1x256xf32, #tpu.memory_space<vmem>>, vector<1x256xf32>
    %21 = vector.broadcast %20 : vector<1x256xf32> to vector<8x256xf32>
    %22 = arith.addf %19, %21 : vector<8x256xf32>
    %c0_16 = arith.constant 0 : index
    %c0_17 = arith.constant 0 : index
    %23 = vector.load %arg3[%c0_16, %c0_17] : memref<8x256xf32, #tpu.memory_space<vmem>>, vector<8x256xf32>
    %cst_18 = arith.constant 0.899999976 : f32
    %24 = vector.broadcast %cst_18 : f32 to vector<8x256xf32>
    %25 = arith.cmpf olt, %23, %24 : vector<8x256xf32>
    %cst_19 = arith.constant 0.000000e+00 : f32
    %26 = vector.broadcast %cst_19 : f32 to vector<8x256xf32>
    %27 = arith.cmpf ogt, %22, %26 : vector<8x256xf32>
    %28 = arith.andi %25, %27 : vector<8x256xi1>
    %cst_20 = arith.constant 1.11111116 : f32
    %29 = vector.broadcast %cst_20 : f32 to vector<8x256xf32>
    %30 = arith.mulf %22, %29 : vector<8x256xf32>
    %cst_21 = arith.constant 0.000000e+00 : f32
    %31 = vector.broadcast %cst_21 : f32 to vector<8x256xf32>
    %32 = arith.select %28, %30, %31 : vector<8x256xi1>, vector<8x256xf32>
    %33 = arith.truncf %32 : vector<8x256xf32> to vector<8x256xbf16>
    %c0_22 = arith.constant 0 : index
    %c0_23 = arith.constant 0 : index
    %34 = vector.load %arg8[%c0_22, %c0_23] : memref<256x1xbf16, #tpu.memory_space<vmem>>, vector<256x1xbf16>
    %cst_24 = arith.constant dense<0.000000e+00> : vector<8x1xf32>
    %35 = tpu.matmul %33, %34, %cst_24 {dimension_numbers = #tpu.dot_dimension_numbers<[1], [0], [0], [1], [0, 0, 1, 1], [], []>} : vector<8x256xbf16>, vector<256x1xbf16>, vector<8x1xf32> -> vector<8x1xf32>
    %c0_25 = arith.constant 0 : index
    %c0_26 = arith.constant 0 : index
    %36 = vector.load %arg9[%c0_25, %c0_26] : memref<1x1xf32, #tpu.memory_space<vmem>>, vector<1x1xf32>
    %37 = vector.broadcast %36 : vector<1x1xf32> to vector<8x1xf32>
    %38 = arith.addf %35, %37 : vector<8x1xf32>
    %39 = arith.negf %38 : vector<8x1xf32>
    %40 = math.exp %39 : vector<8x1xf32>
    %cst_27 = arith.constant 1.000000e+00 : f32
    %41 = vector.broadcast %cst_27 : f32 to vector<8x1xf32>
    %42 = arith.addf %41, %40 : vector<8x1xf32>
    %43 = arith.divf %41, %42 : vector<8x1xf32>
    %c0_28 = arith.constant 0 : index
    %c0_29 = arith.constant 0 : index
    %44 = vector.load %arg10[%c0_28, %c0_29] : memref<8x1xf32, #tpu.memory_space<vmem>>, vector<8x1xf32>
    tpu.vector_store %arg10[%c0_28, %c0_29], %43 {strides = array<i32>} : memref<8x1xf32, #tpu.memory_space<vmem>>, vector<8x1xf32>,
    return
  }
  func.func @transform_0(%arg0: i32) -> (i32, i32) {
    %c0_i32 = arith.constant 0 : i32
    %c0_i32_0 = arith.constant 0 : i32
    return %arg0, %c0_i32 : i32, i32
  }
  func.func @transform_1(%arg0: i32) -> (i32, i32) {
    %c0_i32 = arith.constant 0 : i32
    %c0_i32_0 = arith.constant 0 : i32
    return %arg0, %c0_i32 : i32, i32
  }
  func.func @transform_2(%arg0: i32) -> (i32, i32) {
    %c0_i32 = arith.constant 0 : i32
    %c0_i32_0 = arith.constant 0 : i32
    return %arg0, %c0_i32 : i32, i32
  }
  func.func @transform_3(%arg0: i32) -> (i32, i32) {
    %c0_i32 = arith.constant 0 : i32
    %c0_i32_0 = arith.constant 0 : i32
    %c0_i32_1 = arith.constant 0 : i32
    return %c0_i32, %c0_i32_0 : i32, i32
  }
  func.func @transform_4(%arg0: i32) -> (i32, i32) {
    %c0_i32 = arith.constant 0 : i32
    %c0_i32_0 = arith.constant 0 : i32
    %c0_i32_1 = arith.constant 0 : i32
    return %c0_i32, %c0_i32_0 : i32, i32
  }
  func.func @transform_5(%arg0: i32) -> (i32, i32) {
    %c0_i32 = arith.constant 0 : i32
    %c0_i32_0 = arith.constant 0 : i32
    %c0_i32_1 = arith.constant 0 : i32
    return %c0_i32, %c0_i32_0 : i32, i32
  }
  func.func @transform_6(%arg0: i32) -> (i32, i32) {
    %c0_i32 = arith.constant 0 : i32
    %c0_i32_0 = arith.constant 0 : i32
    %c0_i32_1 = arith.constant 0 : i32
    return %c0_i32, %c0_i32_0 : i32, i32
  }
  func.func @transform_7(%arg0: i32) -> (i32, i32) {
    %c0_i32 = arith.constant 0 : i32
    %c0_i32_0 = arith.constant 0 : i32
    %c0_i32_1 = arith.constant 0 : i32
    return %c0_i32, %c0_i32_0 : i32, i32
  }
  func.func @transform_8(%arg0: i32) -> (i32, i32) {
    %c0_i32 = arith.constant 0 : i32
    %c0_i32_0 = arith.constant 0 : i32
    %c0_i32_1 = arith.constant 0 : i32
    return %c0_i32, %c0_i32_0 : i32, i32
  }
  func.func @transform_9(%arg0: i32) -> (i32, i32) {
    %c0_i32 = arith.constant 0 : i32
    %c0_i32_0 = arith.constant 0 : i32
    return %arg0, %c0_i32 : i32, i32
  }
}

</mosaic_0001>

<llo_original>
// kernel: net_sgd_forward.3
$region0: #{net_sgd_forward.3}
  #allocation0 [shape = 'u32[]', space=smem, size = 0x4, offset = 0x4, fixed_abs, tag = 'smem constant byte address 0x4 - core index']
  #allocation1 [shape = 'u32[144,128]{1,0:T(1,128)}', space=vmem, size = 0x12000, scoped, tag = 'internal scratch']
  #allocation2 [shape = 'f32[1,1]{1,0:T(1,128)S(1)}', space=vmem, size = 0x200, scoped, tag = 'scoped memory for net_sgd_forward.3']
  %s0 = inlined_call_operand.hbm [shape: f32[8,35], index: 0, kind: input, shape index: {}]
  %s1 = inlined_call_operand.hbm [shape: f32[8,512], index: 1, kind: input, shape index: {}]
  %s2 = inlined_call_operand.hbm [shape: f32[8,256], index: 2, kind: input, shape index: {}]
  %s3 = inlined_call_operand.hbm [shape: bf16[35,512], index: 3, kind: input, shape index: {}]
  %s4 = inlined_call_operand.hbm [shape: f32[1,512], index: 4, kind: input, shape index: {}]
  %s5 = inlined_call_operand.hbm [shape: bf16[512,256], index: 5, kind: input, shape index: {}]
  %s6 = inlined_call_operand.hbm [shape: f32[1,256], index: 6, kind: input, shape index: {}]
  %s7 = inlined_call_operand.hbm [shape: bf16[256,1], index: 7, kind: input, shape index: {}]
  %s8 = inlined_call_operand.<no memory space> [shape: f32[1,1], index: 8, kind: input, shape index: {}]
  %s9 = inlined_call_operand.hbm [shape: f32[8,1], index: 9, kind: output, shape index: {}]
  %s10 = sld [smem:[#allocation0]]
  $region78: #{net_sgd_forward.3} parent=0
    _
  %s12 = ssub.s32 1, %s10
  %s13 = scalar_select 0, %s12, %s10
  %v14 = vstv %s8
  %15 = vst [vmem:[#allocation2] sm:$0x1] %v14
  $region1: #{net_sgd_forward.3} parent=0
    #allocation3 [shape = 'u8[4096]{0}', space=vmem, size = 0x1000, scoped, tag = 'input window, operand 0, single buffered']
    #allocation4 [shape = 's32[1]{0}', space=sflag, size = 0x4, scoped, tag = 'scoped memory for net_sgd_forward.3']
    #allocation5 [shape = 's32[1]{0}', space=sflag, size = 0x4, scoped, tag = 'scoped memory for net_sgd_forward.3']
    #allocation6 [shape = 'u8[16384]{0}', space=vmem, size = 0x4000, scoped, tag = 'input window, operand 1, single buffered']
    #allocation7 [shape = 's32[1]{0}', space=sflag, size = 0x4, scoped, tag = 'scoped memory for net_sgd_forward.3']
    #allocation8 [shape = 'u8[8192]{0}', space=vmem, size = 0x2000, scoped, tag = 'input window, operand 2, single buffered']
    #allocation9 [shape = 'u8[40960]{0}', space=vmem, size = 0xa000, scoped, tag = 'input window, operand 3, single buffered']
    #allocation10 [shape = 's32[1]{0}', space=sflag, size = 0x4, scoped, tag = 'scoped memory for net_sgd_forward.3']
    #allocation11 [shape = 'u8[2048]{0}', space=vmem, size = 0x800, scoped, tag = 'input window, operand 4, single buffered']
    #allocation12 [shape = 'u8[262144]{0}', space=vmem, size = 0x40000, scoped, tag = 'input window, operand 5, single buffered']
    #allocation13 [shape = 's32[1]{0}', space=sflag, size = 0x4, scoped, tag = 'scoped memory for net_sgd_forward.3']
    #allocation14 [shape = 'u8[1024]{0}', space=vmem, size = 0x400, scoped, tag = 'input window, operand 6, single buffered']
    #allocation15 [shape = 'u8[65536]{0}', space=vmem, size = 0x10000, scoped, tag = 'input window, operand 7, single buffered']
    #allocation16 [shape = 's32[1]{0}', space=sflag, size = 0x4, scoped, tag = 'scoped memory for net_sgd_forward.3']
    #allocation17 [shape = 'u8[4096]{0}', space=vmem, size = 0x1000, scoped, tag = 'output window, operand 0, single buffered']
    %16 = vsyncpa [#allocation4], 0
    %17 = vsyncpa [#allocation7], 0
    %18 = vsyncpa [#allocation10], 0
    %19 = vsyncpa [#allocation13], 0
    %20 = vsyncpa [#allocation16], 0
    %21 = vsyncpa [#allocation5], 0
    // Predicated region
    $region2: #{net_sgd_forward.3} parent=1 // pred_check
      _
    $region3: #{net_sgd_forward.3} parent=1 // pred_check_branch
      %23 = sbr.rel (0) target = $region5
    $region4: #{net_sgd_forward.3} parent=1 // pred_region
      %s25 = ssub.s32 128, 128
      %26 = vsyncadd [#allocation4], %s25
      %s28 = sshll.u32 [#allocation3], 4
      %s29 = int_to_ptr.vmem [resolvable:$true] %s28
      %31 = dma.hbm_to_vmem [thread:$0]  %s0, 128, %s29, [#allocation4]
    $region5: #{net_sgd_forward.3} parent=1 // pred_fallthru
      _
    // Predicated region
    $region6: #{net_sgd_forward.3} parent=1 // pred_check
      _
    $region7: #{net_sgd_forward.3} parent=1 // pred_check_branch
      %33 = sbr.rel (0) target = $region9
    $region8: #{net_sgd_forward.3} parent=1 // pred_region
      %s35 = ssub.s32 512, 512
      %36 = vsyncadd [#allocation7], %s35
      %s38 = sshll.u32 [#allocation6], 4
      %s39 = int_to_ptr.vmem [resolvable:$true] %s38
      %41 = dma.hbm_to_vmem [thread:$0]  %s1, 512, %s39, [#allocation7]
    $region9: #{net_sgd_forward.3} parent=1 // pred_fallthru
      _
    // Predicated region
    $region10: #{net_sgd_forward.3} parent=1 // pred_check
      _
    $region11: #{net_sgd_forward.3} parent=1 // pred_check_branch
      %43 = sbr.rel (0) target = $region13
    $region12: #{net_sgd_forward.3} parent=1 // pred_region
      %s45 = ssub.s32 256, 256
      %46 = vsyncadd [#allocation7], %s45
      %s48 = sshll.u32 [#allocation8], 4
      %s49 = int_to_ptr.vmem [resolvable:$true] %s48
      %51 = dma.hbm_to_vmem [thread:$0]  %s2, 256, %s49, [#allocation7]
    $region13: #{net_sgd_forward.3} parent=1 // pred_fallthru
      _
    // Predicated region
    $region14: #{net_sgd_forward.3} parent=1 // pred_check
      _
    $region15: #{net_sgd_forward.3} parent=1 // pred_check_branch
      %53 = sbr.rel (0) target = $region17
    $region16: #{net_sgd_forward.3} parent=1 // pred_region
      %s55 = ssub.s32 1280, 1280
      %56 = vsyncadd [#allocation10], %s55
      %s57 = sshll.u32 [#allocation9], 4
      %s58 = int_to_ptr.vmem [resolvable:$true] %s57
      %63 = dma.hbm_to_vmem [thread:$0]  %s3, 1280, %s58, [#allocation10], 256, 256, 16
    $region17: #{net_sgd_forward.3} parent=1 // pred_fallthru
      _
    // Predicated region
    $region18: #{net_sgd_forward.3} parent=1 // pred_check
      _
    $region19: #{net_sgd_forward.3} parent=1 // pred_check_branch
      %65 = sbr.rel (0) target = $region21
    $region20: #{net_sgd_forward.3} parent=1 // pred_region
      %s67 = ssub.s32 64, 64
      %68 = vsyncadd [#allocation10], %s67
      %s70 = sshll.u32 [#allocation11], 4
      %s71 = int_to_ptr.vmem [resolvable:$true] %s70
      %73 = dma.hbm_to_vmem [thread:$0]  %s4, 64, %s71, [#allocation10]
    $region21: #{net_sgd_forward.3} parent=1 // pred_fallthru
      _
    // Predicated region
    $region22: #{net_sgd_forward.3} parent=1 // pred_check
      _
    $region23: #{net_sgd_forward.3} parent=1 // pred_check_branch
      %75 = sbr.rel (0) target = $region25
    $region24: #{net_sgd_forward.3} parent=1 // pred_region
      %s77 = ssub.s32 8192, 8192
      %78 = vsyncadd [#allocation13], %s77
      %s79 = sshll.u32 [#allocation12], 4
      %s80 = int_to_ptr.vmem [resolvable:$true] %s79
      %85 = dma.hbm_to_vmem [thread:$0]  %s5, 8192, %s80, [#allocation13], 128, 128, 8
    $region25: #{net_sgd_forward.3} parent=1 // pred_fallthru
      _
    // Predicated region
    $region26: #{net_sgd_forward.3} parent=1 // pred_check
      _
    $region27: #{net_sgd_forward.3} parent=1 // pred_check_branch
      %87 = sbr.rel (0) target = $region29
    $region28: #{net_sgd_forward.3} parent=1 // pred_region
      %s89 = ssub.s32 32, 32
      %90 = vsyncadd [#allocation13], %s89
      %s92 = sshll.u32 [#allocation14], 4
      %s93 = int_to_ptr.vmem [resolvable:$true] %s92
      %95 = dma.hbm_to_vmem [thread:$0]  %s6, 32, %s93, [#allocation13]
    $region29: #{net_sgd_forward.3} parent=1 // pred_fallthru
      _
    // Predicated region
    $region30: #{net_sgd_forward.3} parent=1 // pred_check
      _
    $region31: #{net_sgd_forward.3} parent=1 // pred_check_branch
      %97 = sbr.rel (0) target = $region33
    $region32: #{net_sgd_forward.3} parent=1 // pred_region
      %s99 = ssub.s32 2048, 2048
      %100 = vsyncadd [#allocation16], %s99
      %s101 = sshll.u32 [#allocation15], 4
      %s102 = int_to_ptr.vmem [resolvable:$true] %s101
      %107 = dma.hbm_to_vmem [thread:$0]  %s7, 2048, %s102, [#allocation16], 64, 64, 4
    $region33: #{net_sgd_forward.3} parent=1 // pred_fallthru
      _
    // Predicated region
    $region34: #{net_sgd_forward.3} parent=1 // pred_check
      _
    $region35: #{net_sgd_forward.3} parent=1 // pred_check_branch
      %109 = sbr.rel (0) target = $region37
    $region36: #{net_sgd_forward.3} parent=1 // pred_region
      _
    $region37: #{net_sgd_forward.3} parent=1 // pred_fallthru
      _
    // Predicated region
    $region38: #{net_sgd_forward.3} parent=1 // pred_check
      _
    $region39: #{net_sgd_forward.3} parent=1 // pred_check_branch
      %111 = sbr.rel (0) target = $region41
    $region40: #{net_sgd_forward.3} parent=1 // pred_region
      %112 = dma.done [#allocation4], 128
    $region41: #{net_sgd_forward.3} parent=1 // pred_fallthru
      _
    // Predicated region
    $region42: #{net_sgd_forward.3} parent=1 // pred_check
      _
    $region43: #{net_sgd_forward.3} parent=1 // pred_check_branch
      %114 = sbr.rel (0) target = $region45
    $region44: #{net_sgd_forward.3} parent=1 // pred_region
      %115 = dma.done [#allocation7], 512
    $region45: #{net_sgd_forward.3} parent=1 // pred_fallthru
      _
    // Predicated region
    $region46: #{net_sgd_forward.3} parent=1 // pred_check
      _
    $region47: #{net_sgd_forward.3} parent=1 // pred_check_branch
      %117 = sbr.rel (0) target = $region49
    $region48: #{net_sgd_forward.3} parent=1 // pred_region
      %118 = dma.done [#allocation7], 256
    $region49: #{net_sgd_forward.3} parent=1 // pred_fallthru
      _
    // Predicated region
    $region50: #{net_sgd_forward.3} parent=1 // pred_check
      _
    $region51: #{net_sgd_forward.3} parent=1 // pred_check_branch
      %120 = sbr.rel (0) target = $region53
    $region52: #{net_sgd_forward.3} parent=1 // pred_region
      %121 = dma.done [#allocation10], 1280
    $region53: #{net_sgd_forward.3} parent=1 // pred_fallthru
      _
    // Predicated region
    $region54: #{net_sgd_forward.3} parent=1 // pred_check
      _
    $region55: #{net_sgd_forward.3} parent=1 // pred_check_branch
      %123 = sbr.rel (0) target = $region57
    $region56: #{net_sgd_forward.3} parent=1 // pred_region
      %124 = dma.done [#allocation10], 64
    $region57: #{net_sgd_forward.3} parent=1 // pred_fallthru
      _
    // Predicated region
    $region58: #{net_sgd_forward.3} parent=1 // pred_check
      _
    $region59: #{net_sgd_forward.3} parent=1 // pred_check_branch
      %126 = sbr.rel (0) target = $region61
    $region60: #{net_sgd_forward.3} parent=1 // pred_region
      %127 = dma.done [#allocation13], 8192
    $region61: #{net_sgd_forward.3} parent=1 // pred_fallthru
      _
    // Predicated region
    $region62: #{net_sgd_forward.3} parent=1 // pred_check
      _
    $region63: #{net_sgd_forward.3} parent=1 // pred_check_branch
      %129 = sbr.rel (0) target = $region65
    $region64: #{net_sgd_forward.3} parent=1 // pred_region
      %130 = dma.done [#allocation13], 32
    $region65: #{net_sgd_forward.3} parent=1 // pred_fallthru
      _
    // Predicated region
    $region66: #{net_sgd_forward.3} parent=1 // pred_check
      _
    $region67: #{net_sgd_forward.3} parent=1 // pred_check_branch
      %132 = sbr.rel (0) target = $region69
    $region68: #{net_sgd_forward.3} parent=1 // pred_region
      %133 = dma.done [#allocation16], 2048
    $region69: #{net_sgd_forward.3} parent=1 // pred_fallthru
      _
    %v135 = vld [vmem:[#allocation3] sm:$0xff]
    %v136 = vpack.c.bf16 %v135, %v135
    %v137 = vld [vmem:[#allocation9] sm:$0xff]
    %v138 = vld [vmem:[#allocation9 + $0x8] sm:$0xff]
    %v139 = vld [vmem:[#allocation9 + $0x10] sm:$0xff]
    %v140 = vld [vmem:[#allocation9 + $0x18] sm:$0xff]
    %v141 = vld [vmem:[#allocation9 + $0x20] sm:$0xff]
    %v142 = vld [vmem:[#allocation9 + $0x28] sm:$0xff]
    %v143 = vld [vmem:[#allocation9 + $0x30] sm:$0xff]
    %v144 = vld [vmem:[#allocation9 + $0x38] sm:$0xff]
    %v145 = vld [vmem:[#allocation9 + $0x40] sm:$0x33]
    %v146 = vld [vmem:[#allocation9 + $0x48] sm:$0x33]
    %v147 = vld [vmem:[#allocation11] sm:$0xf]
    %v149 = vlaneseq
    %v150 = vshrl.u32 %v149, 7
    %v151 = vsub.s32 0, %v150
    %v152 = vrot.slane %v147, %v151
    %v153 = vlaneseq
    %v154 = vshrl.u32 %v153, 7
    %v155 = vsub.s32 1, %v154
    %v156 = vrot.slane %v147, %v155
    %v157 = vlaneseq
    %v158 = vshrl.u32 %v157, 7
    %v159 = vsub.s32 2, %v158
    %v160 = vrot.slane %v147, %v159
    %v161 = vlaneseq
    %v162 = vshrl.u32 %v161, 7
    %v163 = vsub.s32 3, %v162
    %v164 = vrot.slane %v147, %v163
    %v179 = vunpack.c.l.b16 %v137
    %v180 = vunpack.c.h.b16 %v137
    %v181 = vunpack.c.l.b16 %v138
    %v182 = vunpack.c.h.b16 %v138
    %v183 = vunpack.c.l.b16 %v139
    %v184 = vunpack.c.h.b16 %v139
    %v185 = vunpack.c.l.b16 %v140
    %v186 = vunpack.c.h.b16 %v140
    %v187 = vunpack.c.l.b16 %v141
    %v188 = vunpack.c.h.b16 %v141
    %v189 = vunpack.c.l.b16 %v142
    %v190 = vunpack.c.h.b16 %v142
    %v191 = vunpack.c.l.b16 %v143
    %v192 = vunpack.c.h.b16 %v143
    %v193 = vunpack.c.l.b16 %v144
    %v194 = vunpack.c.h.b16 %v144
    %v195 = vunpack.c.l.b16 %v145
    %v196 = vunpack.c.h.b16 %v145
    %v197 = vunpack.c.l.b16 %v146
    %v198 = vunpack.c.h.b16 %v146
    %v199 = vpack.c.b16 %v183, %v179
    %v200 = vpack.c.b16 %v184, %v180
    %v201 = vpack.c.b16 %v185, %v181
    %v202 = vpack.c.b16 %v186, %v182
    %v203 = vpack.c.b16 %v191, %v187
    %v204 = vpack.c.b16 %v192, %v188
    %v205 = vpack.c.b16 %v193, %v189
    %v206 = vpack.c.b16 %v194, %v190
    %v207 = vpack.c.b16 %v195, %v195
    %v208 = vpack.c.b16 %v196, %v196
    %v209 = vpack.c.b16 %v197, %v197
    %v210 = vpack.c.b16 %v198, %v198
    %vm219 = vcmask 285696
    %v221 = vsel %vm219, %v136, 0
    %vm223 = vcmask 1040384
    %vm224 = vcmask 1041408
    %v225 = vsel %vm223, 4294967295, 65535
    %v226 = vsel %vm224, %v225, 0
    %v228 = vand.u32 %v207, %v226
    %v231 = vand.u32 %v208, %v226
    %v234 = vand.u32 %v209, %v226
    %v237 = vand.u32 %v210, %v226
    %239 = vmatprep.subr.bf16.mxu0 %v200
    %240 = vmatpush1.bf16.msra.mxu0 %v199
    %241 = vmatprep.subr.bf16.mxu0 %v204
    %242 = vmatpush1.bf16.msra.mxu0 %v203
    %243 = vmatprep.subr.bf16.mxu0 %v231
    %244 = vmatpush1.bf16.msra.mxu0 %v228
    %245 = vmatprep.subr.bf16.mxu0 0
    %246 = vmatpush1.bf16.msra.mxu0 0
    %247 = vmatprep.subr.bf16.mxu0 0
    %248 = vmatpush1.bf16.msra.mxu0 0
    %249 = vmatprep.subr.bf16.mxu0 0
    %250 = vmatpush1.bf16.msra.mxu0 0
    %251 = vmatprep.subr.bf16.mxu0 0
    %252 = vmatpush1.bf16.msra.mxu0 0
    %253 = vmatprep.subr.bf16.mxu0 0
    %254 = vmatpush1.bf16.msra.mxu0 0
    %255 = vmatprep.subr.bf16.mxu0 0
    %256 = vmatpush1.bf16.msra.mxu0 0
    %257 = vmatprep.subr.bf16.mxu0 0
    %258 = vmatpush1.bf16.msra.mxu0 0
    %259 = vmatprep.subr.bf16.mxu0 0
    %260 = vmatpush1.bf16.msra.mxu0 0
    %261 = vmatprep.subr.bf16.mxu0 0
    %262 = vmatpush1.bf16.msra.mxu0 0
    %263 = vmatprep.subr.bf16.mxu0 0
    %264 = vmatpush1.bf16.msra.mxu0 0
    %265 = vmatprep.subr.bf16.mxu0 0
    %266 = vmatpush1.bf16.msra.mxu0 0
    %267 = vmatprep.subr.bf16.mxu0 0
    %268 = vmatpush1.bf16.msra.mxu0 0
    %269 = vmatprep.subr.bf16.mxu0 0
    %270 = vmatpush1.bf16.msra.mxu0 0
    %271 = vmatprep.mubr.bf16.mxu0 0
    %272 = vmatmul.mubr.bf16.gmra.mrb[0].mxu0 %v221
    %v273 = vpop.f32.mrb[0].mxu0
    %v274 = vadd.f32 %v152, %v273
    %v275 = vpop.f32.mrb[0].mxu0
    %v276 = vadd.f32 %v156, %v275
    %v277 = vpop.f32.mrb[0].mxu0
    %v278 = vpop.f32.mrb[0].mxu0
    %279 = vdwg.mxu0
    %280 = vmatprep.subr.bf16.mxu0 %v202
    %281 = vmatpush1.bf16.msra.mxu0 %v201
    %282 = vmatprep.subr.bf16.mxu0 %v206
    %283 = vmatpush1.bf16.msra.mxu0 %v205
    %284 = vmatprep.subr.bf16.mxu0 %v237
    %285 = vmatpush1.bf16.msra.mxu0 %v234
    %286 = vmatprep.subr.bf16.mxu0 0
    %287 = vmatpush1.bf16.msra.mxu0 0
    %288 = vmatprep.subr.bf16.mxu0 0
    %289 = vmatpush1.bf16.msra.mxu0 0
    %290 = vmatprep.subr.bf16.mxu0 0
    %291 = vmatpush1.bf16.msra.mxu0 0
    %292 = vmatprep.subr.bf16.mxu0 0
    %293 = vmatpush1.bf16.msra.mxu0 0
    %294 = vmatprep.subr.bf16.mxu0 0
    %295 = vmatpush1.bf16.msra.mxu0 0
    %296 = vmatprep.subr.bf16.mxu0 0
    %297 = vmatpush1.bf16.msra.mxu0 0
    %298 = vmatprep.subr.bf16.mxu0 0
    %299 = vmatpush1.bf16.msra.mxu0 0
    %300 = vmatprep.subr.bf16.mxu0 0
    %301 = vmatpush1.bf16.msra.mxu0 0
    %302 = vmatprep.subr.bf16.mxu0 0
    %303 = vmatpush1.bf16.msra.mxu0 0
    %304 = vmatprep.subr.bf16.mxu0 0
    %305 = vmatpush1.bf16.msra.mxu0 0
    %306 = vmatprep.subr.bf16.mxu0 0
    %307 = vmatpush1.bf16.msra.mxu0 0
    %308 = vmatprep.subr.bf16.mxu0 0
    %309 = vmatpush1.bf16.msra.mxu0 0
    %310 = vmatprep.subr.bf16.mxu0 0
    %311 = vmatpush1.bf16.msra.mxu0 0
    %312 = vmatprep.mubr.bf16.mxu0 0
    %313 = vmatmul.mubr.bf16.gmra.mrb[0].mxu0 %v221
    %v314 = vpop.f32.mrb[0].mxu0
    %v315 = vadd.f32 %v160, %v314
    %v316 = vpop.f32.mrb[0].mxu0
    %v317 = vadd.f32 %v164, %v316
    %v318 = vpop.f32.mrb[0].mxu0
    %v319 = vpop.f32.mrb[0].mxu0
    %320 = vdwg.mxu0
    %v321 = vld [vmem:[#allocation6] sm:$0xff]
    %v322 = vld [vmem:[#allocation6 + $0x8] sm:$0xff]
    %v323 = vld [vmem:[#allocation6 + $0x10] sm:$0xff]
    %v324 = vld [vmem:[#allocation6 + $0x18] sm:$0xff]
    %vm325 = vcmp.lt.f32.partialorder %v321, 0.9
    %vm326 = vcmp.lt.f32.partialorder %v322, 0.9
    %vm327 = vcmp.lt.f32.partialorder %v323, 0.9
    %vm328 = vcmp.lt.f32.partialorder %v324, 0.9
    %vm329 = vcmp.gt.f32.partialorder %v274, 0.0
    %vm330 = vcmp.gt.f32.partialorder %v276, 0.0
    %vm331 = vcmp.gt.f32.partialorder %v315, 0.0
    %vm332 = vcmp.gt.f32.partialorder %v317, 0.0
    %vm333 = vmand %vm325, %vm329
    %vm334 = vmand %vm326, %vm330
    %vm335 = vmand %vm327, %vm331
    %vm336 = vmand %vm328, %vm332
    %v337 = vmul.f32 %v274, 1.1111112
    %v338 = vmul.f32 %v276, 1.1111112
    %v339 = vmul.f32 %v315, 1.1111112
    %v340 = vmul.f32 %v317, 1.1111112
    %v341 = vsel %vm333, %v337, 0.0
    %v342 = vsel %vm334, %v338, 0.0
    %v343 = vsel %vm335, %v339, 0.0
    %v344 = vsel %vm336, %v340, 0.0
    %v345 = vpack.c.bf16 %v341, %v341
    %v346 = vpack.c.bf16 %v342, %v342
    %v347 = vpack.c.bf16 %v343, %v343
    %v348 = vpack.c.bf16 %v344, %v344
    %v349 = vld [vmem:[#allocation12] sm:$0xff]
    %v350 = vld [vmem:[#allocation12 + $0x8] sm:$0xff]
    %v351 = vld [vmem:[#allocation12 + $0x10] sm:$0xff]
    %v352 = vld [vmem:[#allocation12 + $0x18] sm:$0xff]
    %v353 = vld [vmem:[#allocation12 + $0x20] sm:$0xff]
    %v354 = vld [vmem:[#allocation12 + $0x28] sm:$0xff]
    %v355 = vld [vmem:[#allocation12 + $0x30] sm:$0xff]
    %v356 = vld [vmem:[#allocation12 + $0x38] sm:$0xff]
    %v357 = vld [vmem:[#allocation12 + $0x40] sm:$0xff]
    %v358 = vld [vmem:[#allocation12 + $0x48] sm:$0xff]
    %v359 = vld [vmem:[#allocation12 + $0x50] sm:$0xff]
    %v360 = vld [vmem:[#allocation12 + $0x58] sm:$0xff]
    %v361 = vld [vmem:[#allocation12 + $0x60] sm:$0xff]
    %v362 = vld [vmem:[#allocation12 + $0x68] sm:$0xff]
    %v363 = vld [vmem:[#allocation12 + $0x70] sm:$0xff]
    %v364 = vld [vmem:[#allocation12 + $0x78] sm:$0xff]
    %v365 = vld [vmem:[#allocation12 + $0x80] sm:$0xff]
    %v366 = vld [vmem:[#allocation12 + $0x88] sm:$0xff]
    %v367 = vld [vmem:[#allocation12 + $0x90] sm:$0xff]
    %v368 = vld [vmem:[#allocation12 + $0x98] sm:$0xff]
    %v369 = vld [vmem:[#allocation12 + $0xa0] sm:$0xff]
    %v370 = vld [vmem:[#allocation12 + $0xa8] sm:$0xff]
    %v371 = vld [vmem:[#allocation12 + $0xb0] sm:$0xff]
    %v372 = vld [vmem:[#allocation12 + $0xb8] sm:$0xff]
    %v373 = vld [vmem:[#allocation12 + $0xc0] sm:$0xff]
    %v374 = vld [vmem:[#allocation12 + $0xc8] sm:$0xff]
    %v375 = vld [vmem:[#allocation12 + $0xd0] sm:$0xff]
    %v376 = vld [vmem:[#allocation12 + $0xd8] sm:$0xff]
    %v377 = vld [vmem:[#allocation12 + $0xe0] sm:$0xff]
    %v378 = vld [vmem:[#allocation12 + $0xe8] sm:$0xff]
    %v379 = vld [vmem:[#allocation12 + $0xf0] sm:$0xff]
    %v380 = vld [vmem:[#allocation12 + $0xf8] sm:$0xff]
    %v381 = vld [vmem:[#allocation12 + $0x100] sm:$0xff]
    %v382 = vld [vmem:[#allocation12 + $0x108] sm:$0xff]
    %v383 = vld [vmem:[#allocation12 + $0x110] sm:$0xff]
    %v384 = vld [vmem:[#allocation12 + $0x118] sm:$0xff]
    %v385 = vld [vmem:[#allocation12 + $0x120] sm:$0xff]
    %v386 = vld [vmem:[#allocation12 + $0x128] sm:$0xff]
    %v387 = vld [vmem:[#allocation12 + $0x130] sm:$0xff]
    %v388 = vld [vmem:[#allocation12 + $0x138] sm:$0xff]
    %v389 = vld [vmem:[#allocation12 + $0x140] sm:$0xff]
    %v390 = vld [vmem:[#allocation12 + $0x148] sm:$0xff]
    %v391 = vld [vmem:[#allocation12 + $0x150] sm:$0xff]
    %v392 = vld [vmem:[#allocation12 + $0x158] sm:$0xff]
    %v393 = vld [vmem:[#allocation12 + $0x160] sm:$0xff]
    %v394 = vld [vmem:[#allocation12 + $0x168] sm:$0xff]
    %v395 = vld [vmem:[#allocation12 + $0x170] sm:$0xff]
    %v396 = vld [vmem:[#allocation12 + $0x178] sm:$0xff]
    %v397 = vld [vmem:[#allocation12 + $0x180] sm:$0xff]
    %v398 = vld [vmem:[#allocation12 + $0x188] sm:$0xff]
    %v399 = vld [vmem:[#allocation12 + $0x190] sm:$0xff]
    %v400 = vld [vmem:[#allocation12 + $0x198] sm:$0xff]
    %v401 = vld [vmem:[#allocation12 + $0x1a0] sm:$0xff]
    %v402 = vld [vmem:[#allocation12 + $0x1a8] sm:$0xff]
    %v403 = vld [vmem:[#allocation12 + $0x1b0] sm:$0xff]
    %v404 = vld [vmem:[#allocation12 + $0x1b8] sm:$0xff]
    %v405 = vld [vmem:[#allocation12 + $0x1c0] sm:$0xff]
    %v406 = vld [vmem:[#allocation12 + $0x1c8] sm:$0xff]
    %v407 = vld [vmem:[#allocation12 + $0x1d0] sm:$0xff]
    %v408 = vld [vmem:[#allocation12 + $0x1d8] sm:$0xff]
    %v409 = vld [vmem:[#allocation12 + $0x1e0] sm:$0xff]
    %v410 = vld [vmem:[#allocation12 + $0x1e8] sm:$0xff]
    %v411 = vld [vmem:[#allocation12 + $0x1f0] sm:$0xff]
    %v412 = vld [vmem:[#allocation12 + $0x1f8] sm:$0xff]
    %v413 = vld [vmem:[#allocation14] sm:$0x3]
    %v415 = vlaneseq
    %v416 = vshrl.u32 %v415, 7
    %v417 = vsub.s32 0, %v416
    %v418 = vrot.slane %v413, %v417
    %v419 = vlaneseq
    %v420 = vshrl.u32 %v419, 7
    %v421 = vsub.s32 1, %v420
    %v422 = vrot.slane %v413, %v421
    %v489 = vunpack.c.l.b16 %v349
    %v490 = vunpack.c.h.b16 %v349
    %v491 = vunpack.c.l.b16 %v350
    %v492 = vunpack.c.h.b16 %v350
    %v493 = vunpack.c.l.b16 %v351
    %v494 = vunpack.c.h.b16 %v351
    %v495 = vunpack.c.l.b16 %v352
    %v496 = vunpack.c.h.b16 %v352
    %v497 = vunpack.c.l.b16 %v353
    %v498 = vunpack.c.h.b16 %v353
    %v499 = vunpack.c.l.b16 %v354
    %v500 = vunpack.c.h.b16 %v354
    %v501 = vunpack.c.l.b16 %v355
    %v502 = vunpack.c.h.b16 %v355
    %v503 = vunpack.c.l.b16 %v356
    %v504 = vunpack.c.h.b16 %v356
    %v505 = vunpack.c.l.b16 %v357
    %v506 = vunpack.c.h.b16 %v357
    %v507 = vunpack.c.l.b16 %v358
    %v508 = vunpack.c.h.b16 %v358
    %v509 = vunpack.c.l.b16 %v359
    %v510 = vunpack.c.h.b16 %v359
    %v511 = vunpack.c.l.b16 %v360
    %v512 = vunpack.c.h.b16 %v360
    %v513 = vunpack.c.l.b16 %v361
    %v514 = vunpack.c.h.b16 %v361
    %v515 = vunpack.c.l.b16 %v362
    %v516 = vunpack.c.h.b16 %v362
    %v517 = vunpack.c.l.b16 %v363
    %v518 = vunpack.c.h.b16 %v363
    %v519 = vunpack.c.l.b16 %v364
    %v520 = vunpack.c.h.b16 %v364
    %v521 = vunpack.c.l.b16 %v365
    %v522 = vunpack.c.h.b16 %v365
    %v523 = vunpack.c.l.b16 %v366
    %v524 = vunpack.c.h.b16 %v366
    %v525 = vunpack.c.l.b16 %v367
    %v526 = vunpack.c.h.b16 %v367
    %v527 = vunpack.c.l.b16 %v368
    %v528 = vunpack.c.h.b16 %v368
    %v529 = vunpack.c.l.b16 %v369
    %v530 = vunpack.c.h.b16 %v369
    %v531 = vunpack.c.l.b16 %v370
    %v532 = vunpack.c.h.b16 %v370
    %v533 = vunpack.c.l.b16 %v371
    %v534 = vunpack.c.h.b16 %v371
    %v535 = vunpack.c.l.b16 %v372
    %v536 = vunpack.c.h.b16 %v372
    %v537 = vunpack.c.l.b16 %v373
    %v538 = vunpack.c.h.b16 %v373
    %v539 = vunpack.c.l.b16 %v374
    %v540 = vunpack.c.h.b16 %v374
    %v541 = vunpack.c.l.b16 %v375
    %v542 = vunpack.c.h.b16 %v375
    %v543 = vunpack.c.l.b16 %v376
    %v544 = vunpack.c.h.b16 %v376
    %v545 = vunpack.c.l.b16 %v377
    %v546 = vunpack.c.h.b16 %v377
    %v547 = vunpack.c.l.b16 %v378
    %v548 = vunpack.c.h.b16 %v378
    %v549 = vunpack.c.l.b16 %v379
    %v550 = vunpack.c.h.b16 %v379
    %v551 = vunpack.c.l.b16 %v380
    %v552 = vunpack.c.h.b16 %v380
    %v553 = vunpack.c.l.b16 %v381
    %v554 = vunpack.c.h.b16 %v381
    %v555 = vunpack.c.l.b16 %v382
    %v556 = vunpack.c.h.b16 %v382
    %v557 = vunpack.c.l.b16 %v383
    %v558 = vunpack.c.h.b16 %v383
    %v559 = vunpack.c.l.b16 %v384
    %v560 = vunpack.c.h.b16 %v384
    %v561 = vunpack.c.l.b16 %v385
    %v562 = vunpack.c.h.b16 %v385
    %v563 = vunpack.c.l.b16 %v386
    %v564 = vunpack.c.h.b16 %v386
    %v565 = vunpack.c.l.b16 %v387
    %v566 = vunpack.c.h.b16 %v387
    %v567 = vunpack.c.l.b16 %v388
    %v568 = vunpack.c.h.b16 %v388
    %v569 = vunpack.c.l.b16 %v389
    %v570 = vunpack.c.h.b16 %v389
    %v571 = vunpack.c.l.b16 %v390
    %v572 = vunpack.c.h.b16 %v390
    %v573 = vunpack.c.l.b16 %v391
    %v574 = vunpack.c.h.b16 %v391
    %v575 = vunpack.c.l.b16 %v392
    %v576 = vunpack.c.h.b16 %v392
    %v577 = vunpack.c.l.b16 %v393
    %v578 = vunpack.c.h.b16 %v393
    %v579 = vunpack.c.l.b16 %v394
    %v580 = vunpack.c.h.b16 %v394
    %v581 = vunpack.c.l.b16 %v395
    %v582 = vunpack.c.h.b16 %v395
    %v583 = vunpack.c.l.b16 %v396
    %v584 = vunpack.c.h.b16 %v396
    %v585 = vunpack.c.l.b16 %v397
    %v586 = vunpack.c.h.b16 %v397
    %v587 = vunpack.c.l.b16 %v398
    %v588 = vunpack.c.h.b16 %v398
    %v589 = vunpack.c.l.b16 %v399
    %v590 = vunpack.c.h.b16 %v399
    %v591 = vunpack.c.l.b16 %v400
    %v592 = vunpack.c.h.b16 %v400
    %v593 = vunpack.c.l.b16 %v401
    %v594 = vunpack.c.h.b16 %v401
    %v595 = vunpack.c.l.b16 %v402
    %v596 = vunpack.c.h.b16 %v402
    %v597 = vunpack.c.l.b16 %v403
    %v598 = vunpack.c.h.b16 %v403
    %v599 = vunpack.c.l.b16 %v404
    %v600 = vunpack.c.h.b16 %v404
    %v601 = vunpack.c.l.b16 %v405
    %v602 = vunpack.c.h.b16 %v405
    %v603 = vunpack.c.l.b16 %v406
    %v604 = vunpack.c.h.b16 %v406
    %v605 = vunpack.c.l.b16 %v407
    %v606 = vunpack.c.h.b16 %v407
    %v607 = vunpack.c.l.b16 %v408
    %v608 = vunpack.c.h.b16 %v408
    %v609 = vunpack.c.l.b16 %v409
    %v610 = vunpack.c.h.b16 %v409
    %v611 = vunpack.c.l.b16 %v410
    %v612 = vunpack.c.h.b16 %v410
    %v613 = vunpack.c.l.b16 %v411
    %v614 = vunpack.c.h.b16 %v411
    %v615 = vunpack.c.l.b16 %v412
    %v616 = vunpack.c.h.b16 %v412
    %v617 = vpack.c.b16 %v491, %v489
    %v618 = vpack.c.b16 %v492, %v490
    %v619 = vpack.c.b16 %v495, %v493
    %v620 = vpack.c.b16 %v496, %v494
    %v621 = vpack.c.b16 %v499, %v497
    %v622 = vpack.c.b16 %v500, %v498
    %v623 = vpack.c.b16 %v503, %v501
    %v624 = vpack.c.b16 %v504, %v502
    %v625 = vpack.c.b16 %v507, %v505
    %v626 = vpack.c.b16 %v508, %v506
    %v627 = vpack.c.b16 %v511, %v509
    %v628 = vpack.c.b16 %v512, %v510
    %v629 = vpack.c.b16 %v515, %v513
    %v630 = vpack.c.b16 %v516, %v514
    %v631 = vpack.c.b16 %v519, %v517
    %v632 = vpack.c.b16 %v520, %v518
    %v633 = vpack.c.b16 %v523, %v521
    %v634 = vpack.c.b16 %v524, %v522
    %v635 = vpack.c.b16 %v527, %v525
    %v636 = vpack.c.b16 %v528, %v526
    %v637 = vpack.c.b16 %v531, %v529
    %v638 = vpack.c.b16 %v532, %v530
    %v639 = vpack.c.b16 %v535, %v533
    %v640 = vpack.c.b16 %v536, %v534
    %v641 = vpack.c.b16 %v539, %v537
    %v642 = vpack.c.b16 %v540, %v538
    %v643 = vpack.c.b16 %v543, %v541
    %v644 = vpack.c.b16 %v544, %v542
    %v645 = vpack.c.b16 %v547, %v545
    %v646 = vpack.c.b16 %v548, %v546
    %v647 = vpack.c.b16 %v551, %v549
    %v648 = vpack.c.b16 %v552, %v550
    %v649 = vpack.c.b16 %v555, %v553
    %v650 = vpack.c.b16 %v556, %v554
    %v651 = vpack.c.b16 %v559, %v557
    %v652 = vpack.c.b16 %v560, %v558
    %v653 = vpack.c.b16 %v563, %v561
    %v654 = vpack.c.b16 %v564, %v562
    %v655 = vpack.c.b16 %v567, %v565
    %v656 = vpack.c.b16 %v568, %v566
    %v657 = vpack.c.b16 %v571, %v569
    %v658 = vpack.c.b16 %v572, %v570
    %v659 = vpack.c.b16 %v575, %v573
    %v660 = vpack.c.b16 %v576, %v574
    %v661 = vpack.c.b16 %v579, %v577
    %v662 = vpack.c.b16 %v580, %v578
    %v663 = vpack.c.b16 %v583, %v581
    %v664 = vpack.c.b16 %v584, %v582
    %v665 = vpack.c.b16 %v587, %v585
    %v666 = vpack.c.b16 %v588, %v586
    %v667 = vpack.c.b16 %v591, %v589
    %v668 = vpack.c.b16 %v592, %v590
    %v669 = vpack.c.b16 %v595, %v593
    %v670 = vpack.c.b16 %v596, %v594
    %v671 = vpack.c.b16 %v599, %v597
    %v672 = vpack.c.b16 %v600, %v598
    %v673 = vpack.c.b16 %v603, %v601
    %v674 = vpack.c.b16 %v604, %v602
    %v675 = vpack.c.b16 %v607, %v605
    %v676 = vpack.c.b16 %v608, %v606
    %v677 = vpack.c.b16 %v611, %v609
    %v678 = vpack.c.b16 %v612, %v610
    %v679 = vpack.c.b16 %v615, %v613
    %v680 = vpack.c.b16 %v616, %v614
    %745 = vmatprep.subr.bf16.mxu0 %v618
    %746 = vmatpush1.bf16.msra.mxu0 %v617
    %747 = vmatprep.subr.bf16.mxu0 %v620
    %748 = vmatpush1.bf16.msra.mxu0 %v619
    %749 = vmatprep.subr.bf16.mxu0 %v622
    %750 = vmatpush1.bf16.msra.mxu0 %v621
    %751 = vmatprep.subr.bf16.mxu0 %v624
    %752 = vmatpush1.bf16.msra.mxu0 %v623
    %753 = vmatprep.subr.bf16.mxu0 %v626
    %754 = vmatpush1.bf16.msra.mxu0 %v625
    %755 = vmatprep.subr.bf16.mxu0 %v628
    %756 = vmatpush1.bf16.msra.mxu0 %v627
    %757 = vmatprep.subr.bf16.mxu0 %v630
    %758 = vmatpush1.bf16.msra.mxu0 %v629
    %759 = vmatprep.subr.bf16.mxu0 %v632
    %760 = vmatpush1.bf16.msra.mxu0 %v631
    %761 = vmatprep.subr.bf16.mxu0 %v634
    %762 = vmatpush1.bf16.msra.mxu0 %v633
    %763 = vmatprep.subr.bf16.mxu0 %v636
    %764 = vmatpush1.bf16.msra.mxu0 %v635
    %765 = vmatprep.subr.bf16.mxu0 %v638
    %766 = vmatpush1.bf16.msra.mxu0 %v637
    %767 = vmatprep.subr.bf16.mxu0 %v640
    %768 = vmatpush1.bf16.msra.mxu0 %v639
    %769 = vmatprep.subr.bf16.mxu0 %v642
    %770 = vmatpush1.bf16.msra.mxu0 %v641
    %771 = vmatprep.subr.bf16.mxu0 %v644
    %772 = vmatpush1.bf16.msra.mxu0 %v643
    %773 = vmatprep.subr.bf16.mxu0 %v646
    %774 = vmatpush1.bf16.msra.mxu0 %v645
    %775 = vmatprep.subr.bf16.mxu0 %v648
    %776 = vmatpush1.bf16.msra.mxu0 %v647
    %777 = vmatprep.mubr.bf16.mxu0 %v346
    %778 = vmatmul.mubr.bf16.gmra.mrb[0].mxu0 %v345
    %v779 = vpop.f32.mrb[0].mxu0
    %v780 = vadd.f32 %v418, %v779
    %v781 = vpop.f32.mrb[0].mxu0
    %v782 = vadd.f32 %v422, %v781
    %v783 = vpop.f32.mrb[0].mxu0
    %v784 = vpop.f32.mrb[0].mxu0
    %785 = vdwg.mxu0
    %786 = vmatprep.subr.bf16.mxu0 %v650
    %787 = vmatpush1.bf16.msra.mxu0 %v649
    %788 = vmatprep.subr.bf16.mxu0 %v652
    %789 = vmatpush1.bf16.msra.mxu0 %v651
    %790 = vmatprep.subr.bf16.mxu0 %v654
    %791 = vmatpush1.bf16.msra.mxu0 %v653
    %792 = vmatprep.subr.bf16.mxu0 %v656
    %793 = vmatpush1.bf16.msra.mxu0 %v655
    %794 = vmatprep.subr.bf16.mxu0 %v658
    %795 = vmatpush1.bf16.msra.mxu0 %v657
    %796 = vmatprep.subr.bf16.mxu0 %v660
    %797 = vmatpush1.bf16.msra.mxu0 %v659
    %798 = vmatprep.subr.bf16.mxu0 %v662
    %799 = vmatpush1.bf16.msra.mxu0 %v661
    %800 = vmatprep.subr.bf16.mxu0 %v664
    %801 = vmatpush1.bf16.msra.mxu0 %v663
    %802 = vmatprep.subr.bf16.mxu0 %v666
    %803 = vmatpush1.bf16.msra.mxu0 %v665
    %804 = vmatprep.subr.bf16.mxu0 %v668
    %805 = vmatpush1.bf16.msra.mxu0 %v667
    %806 = vmatprep.subr.bf16.mxu0 %v670
    %807 = vmatpush1.bf16.msra.mxu0 %v669
    %808 = vmatprep.subr.bf16.mxu0 %v672
    %809 = vmatpush1.bf16.msra.mxu0 %v671
    %810 = vmatprep.subr.bf16.mxu0 %v674
    %811 = vmatpush1.bf16.msra.mxu0 %v673
    %812 = vmatprep.subr.bf16.mxu0 %v676
    %813 = vmatpush1.bf16.msra.mxu0 %v675
    %814 = vmatprep.subr.bf16.mxu0 %v678
    %815 = vmatpush1.bf16.msra.mxu0 %v677
    %816 = vmatprep.subr.bf16.mxu0 %v680
    %817 = vmatpush1.bf16.msra.mxu0 %v679
    %818 = vmatprep.mubr.bf16.mxu0 %v348
    %819 = vmatmul.mubr.bf16.gmra.mrb[0].mxu0 %v347
    %v820 = vpop.f32.mrb[0].mxu0
    %v821 = vadd.f32 %v780, %v820
    %v822 = vpop.f32.mrb[0].mxu0
    %v823 = vadd.f32 %v782, %v822
    %v824 = vpop.f32.mrb[0].mxu0
    %v825 = vpop.f32.mrb[0].mxu0
    %826 = vdwg.mxu0
    %v827 = vld [vmem:[#allocation8] sm:$0xff]
    %v828 = vld [vmem:[#allocation8 + $0x8] sm:$0xff]
    %vm829 = vcmp.lt.f32.partialorder %v827, 0.9
    %vm830 = vcmp.lt.f32.partialorder %v828, 0.9
    %vm831 = vcmp.gt.f32.partialorder %v821, 0.0
    %vm832 = vcmp.gt.f32.partialorder %v823, 0.0
    %vm833 = vmand %vm829, %vm831
    %vm834 = vmand %vm830, %vm832
    %v835 = vmul.f32 %v821, 1.1111112
    %v836 = vmul.f32 %v823, 1.1111112
    %v837 = vsel %vm833, %v835, 0.0
    %v838 = vsel %vm834, %v836, 0.0
    %v839 = vpack.c.bf16 %v837, %v837
    %v840 = vpack.c.bf16 %v838, %v838
    %v841 = vld [vmem:[#allocation15] sm:$0xf]
    %v842 = vld [vmem:[#allocation15 + $0x4] sm:$0xf]
    %v843 = vld [vmem:[#allocation15 + $0x8] sm:$0xf]
    %v844 = vld [vmem:[#allocation15 + $0xc] sm:$0xf]
    %v845 = vld [vmem:[#allocation15 + $0x10] sm:$0xf]
    %v846 = vld [vmem:[#allocation15 + $0x14] sm:$0xf]
    %v847 = vld [vmem:[#allocation15 + $0x18] sm:$0xf]
    %v848 = vld [vmem:[#allocation15 + $0x1c] sm:$0xf]
    %v849 = vld [vmem:[#allocation15 + $0x20] sm:$0xf]
    %v850 = vld [vmem:[#allocation15 + $0x24] sm:$0xf]
    %v851 = vld [vmem:[#allocation15 + $0x28] sm:$0xf]
    %v852 = vld [vmem:[#allocation15 + $0x2c] sm:$0xf]
    %v853 = vld [vmem:[#allocation15 + $0x30] sm:$0xf]
    %v854 = vld [vmem:[#allocation15 + $0x34] sm:$0xf]
    %v855 = vld [vmem:[#allocation15 + $0x38] sm:$0xf]
    %v856 = vld [vmem:[#allocation15 + $0x3c] sm:$0xf]
    %v857 = vld [vmem:[#allocation15 + $0x40] sm:$0xf]
    %v858 = vld [vmem:[#allocation15 + $0x44] sm:$0xf]
    %v859 = vld [vmem:[#allocation15 + $0x48] sm:$0xf]
    %v860 = vld [vmem:[#allocation15 + $0x4c] sm:$0xf]
    %v861 = vld [vmem:[#allocation15 + $0x50] sm:$0xf]
    %v862 = vld [vmem:[#allocation15 + $0x54] sm:$0xf]
    %v863 = vld [vmem:[#allocation15 + $0x58] sm:$0xf]
    %v864 = vld [vmem:[#allocation15 + $0x5c] sm:$0xf]
    %v865 = vld [vmem:[#allocation15 + $0x60] sm:$0xf]
    %v866 = vld [vmem:[#allocation15 + $0x64] sm:$0xf]
    %v867 = vld [vmem:[#allocation15 + $0x68] sm:$0xf]
    %v868 = vld [vmem:[#allocation15 + $0x6c] sm:$0xf]
    %v869 = vld [vmem:[#allocation15 + $0x70] sm:$0xf]
    %v870 = vld [vmem:[#allocation15 + $0x74] sm:$0xf]
    %v871 = vld [vmem:[#allocation15 + $0x78] sm:$0xf]
    %v872 = vld [vmem:[#allocation15 + $0x7c] sm:$0xf]
    %v873 = vld [vmem:[#allocation2] sm:$0x1]
    %v875 = vlaneseq
    %v876 = vshrl.u32 %v875, 7
    %v877 = vsub.s32 0, %v876
    %v878 = vrot.slane %v873, %v877
    %v912 = vunpack.c.l.b16 %v841
    %v913 = vunpack.c.l.b16 %v842
    %v914 = vunpack.c.l.b16 %v843
    %v915 = vunpack.c.l.b16 %v844
    %v916 = vunpack.c.l.b16 %v845
    %v917 = vunpack.c.l.b16 %v846
    %v918 = vunpack.c.l.b16 %v847
    %v919 = vunpack.c.l.b16 %v848
    %v920 = vunpack.c.l.b16 %v849
    %v921 = vunpack.c.l.b16 %v850
    %v922 = vunpack.c.l.b16 %v851
    %v923 = vunpack.c.l.b16 %v852
    %v924 = vunpack.c.l.b16 %v853
    %v925 = vunpack.c.l.b16 %v854
    %v926 = vunpack.c.l.b16 %v855
    %v927 = vunpack.c.l.b16 %v856
    %v928 = vunpack.c.l.b16 %v857
    %v929 = vunpack.c.l.b16 %v858
    %v930 = vunpack.c.l.b16 %v859
    %v931 = vunpack.c.l.b16 %v860
    %v932 = vunpack.c.l.b16 %v861
    %v933 = vunpack.c.l.b16 %v862
    %v934 = vunpack.c.l.b16 %v863
    %v935 = vunpack.c.l.b16 %v864
    %v936 = vunpack.c.l.b16 %v865
    %v937 = vunpack.c.l.b16 %v866
    %v938 = vunpack.c.l.b16 %v867
    %v939 = vunpack.c.l.b16 %v868
    %v940 = vunpack.c.l.b16 %v869
    %v941 = vunpack.c.l.b16 %v870
    %v942 = vunpack.c.l.b16 %v871
    %v943 = vunpack.c.l.b16 %v872
    %v944 = vpack.c.b16 %v913, %v912
    %v945 = vpack.c.b16 %v915, %v914
    %v946 = vpack.c.b16 %v917, %v916
    %v947 = vpack.c.b16 %v919, %v918
    %v948 = vpack.c.b16 %v921, %v920
    %v949 = vpack.c.b16 %v923, %v922
    %v950 = vpack.c.b16 %v925, %v924
    %v951 = vpack.c.b16 %v927, %v926
    %v952 = vpack.c.b16 %v929, %v928
    %v953 = vpack.c.b16 %v931, %v930
    %v954 = vpack.c.b16 %v933, %v932
    %v955 = vpack.c.b16 %v935, %v934
    %v956 = vpack.c.b16 %v937, %v936
    %v957 = vpack.c.b16 %v939, %v938
    %v958 = vpack.c.b16 %v941, %v940
    %v959 = vpack.c.b16 %v943, %v942
    %976 = vmatprep.subr.bf16.mxu0 0
    %977 = vmatpush1.bf16.msra.mxu0 %v944
    %978 = vmatprep.subr.bf16.mxu0 0
    %979 = vmatpush1.bf16.msra.mxu0 %v945
    %980 = vmatprep.subr.bf16.mxu0 0
    %981 = vmatpush1.bf16.msra.mxu0 %v946
    %982 = vmatprep.subr.bf16.mxu0 0
    %983 = vmatpush1.bf16.msra.mxu0 %v947
    %984 = vmatprep.subr.bf16.mxu0 0
    %985 = vmatpush1.bf16.msra.mxu0 %v948
    %986 = vmatprep.subr.bf16.mxu0 0
    %987 = vmatpush1.bf16.msra.mxu0 %v949
    %988 = vmatprep.subr.bf16.mxu0 0
    %989 = vmatpush1.bf16.msra.mxu0 %v950
    %990 = vmatprep.subr.bf16.mxu0 0
    %991 = vmatpush1.bf16.msra.mxu0 %v951
    %992 = vmatprep.subr.bf16.mxu0 0
    %993 = vmatpush1.bf16.msra.mxu0 %v952
    %994 = vmatprep.subr.bf16.mxu0 0
    %995 = vmatpush1.bf16.msra.mxu0 %v953
    %996 = vmatprep.subr.bf16.mxu0 0
    %997 = vmatpush1.bf16.msra.mxu0 %v954
    %998 = vmatprep.subr.bf16.mxu0 0
    %999 = vmatpush1.bf16.msra.mxu0 %v955
    %1000 = vmatprep.subr.bf16.mxu0 0
    %1001 = vmatpush1.bf16.msra.mxu0 %v956
    %1002 = vmatprep.subr.bf16.mxu0 0
    %1003 = vmatpush1.bf16.msra.mxu0 %v957
    %1004 = vmatprep.subr.bf16.mxu0 0
    %1005 = vmatpush1.bf16.msra.mxu0 %v958
    %1006 = vmatprep.subr.bf16.mxu0 0
    %1007 = vmatpush1.bf16.msra.mxu0 %v959
    %1008 = vmatprep.mubr.bf16.mxu0 %v840
    %1009 = vmatmul.mubr.bf16.gmra.mrb[0].mxu0 %v839
    %v1010 = vpop.f32.mrb[0].mxu0
    %v1011 = vadd.f32 %v878, %v1010
    %v1012 = vpop.f32.mrb[0].mxu0
    %v1013 = vpop.f32.mrb[0].mxu0
    %v1014 = vpop.f32.mrb[0].mxu0
    %1015 = vdwg.mxu0
    %v1016 = vxor.u32 %v1011, 2147483648
    %v1017 = vmul.f32 %v1016, 1.442695
    %v1018 = vpow.pop %v1017
    %v1019 = vadd.f32 %v1018, 1.0
    %v1020 = vrcp.pop %v1019
    %v1021 = vmul.f32 1.0, %v1020
    %vm1022 = vcmask 7168
    %1023 = vst.msk [vmem:[#allocation17] sm:$0xff] %vm1022, %v1021
    // Predicated region
    $region70: #{net_sgd_forward.3} parent=1 // pred_check
      _
    $region71: #{net_sgd_forward.3} parent=1 // pred_check_branch
      %1025 = sbr.rel (0) target = $region73
    $region72: #{net_sgd_forward.3} parent=1 // pred_region
      %s1027 = ssub.s32 128, 128
      %1028 = vsyncadd [#allocation5], %s1027
      %s1030 = sshll.u32 [#allocation17], 4
      %s1031 = int_to_ptr.vmem [resolvable:$true] %s1030
      %1033 = dma.vmem_to_hbm [thread:$0]  %s1031, 128, %s9, [#allocation5]
    $region73: #{net_sgd_forward.3} parent=1 // pred_fallthru
      _
    // Predicated region
    $region74: #{net_sgd_forward.3} parent=1 // pred_check
      _
    $region75: #{net_sgd_forward.3} parent=1 // pred_check_branch
      %1035 = sbr.rel (0) target = $region77
    $region76: #{net_sgd_forward.3} parent=1 // pred_region
      %1036 = dma.done [#allocation5], 128
    $region77: #{net_sgd_forward.3} parent=1 // pred_fallthru
      _
    %1037 = vsyncpa [#allocation4], 1
    %1038 = vsyncpa [#allocation7], 1
    %1039 = vsyncpa [#allocation10], 1
    %1040 = vsyncpa [#allocation13], 1
    %1041 = vsyncpa [#allocation16], 1
    %1042 = vsyncpa [#allocation5], 1

</llo_original>
